<compile_context>
chip_gen: v7x
topology: tpu7x:2x2x1
jax: 0.10.0
libtpu: 0.0.40
codegen_flags: <defaults>
</compile_context>

<pallas_src>
import functools

import jax
import jax.numpy as jnp
from jax import lax
from jax.experimental import pallas as pl
from jax.experimental.pallas import tpu as pltpu


# ----------------------------- Pallas kernel --------------------------------
def _mixed_kernel(masks_ref,   # SMEM (3,)  gumbel-softmax weights
                  lhs_ref,     # (tm, Kpad)       bf16 H-halo patch slab
                  w_ref,       # (Kpad, 2*W*Cout) bf16 fused banded conv weights
                  b_ref,       # (1, 2*W*Cout)    f32  fused bias
                  xid_ref,     # (tm, W*Cout)     f32  identity branch (lane dense)
                  o_ref):      # (tm, W*Cout)     f32  output (lane dense)
    wc = o_ref.shape[1]
    # Single fused MXU matmul produces both conv branches (f32 accumulation).
    y = jnp.dot(lhs_ref[...], w_ref[...], preferred_element_type=jnp.float32)
    y = jnp.clip(y + b_ref[...], 0.0, 6.0)          # bias + ReLU6 in f32
    y3 = y[:, :wc]                                   # op0: 3x3 conv branch
    y5 = y[:, wc:]                                   # op1: 5x5 conv branch
    m0 = masks_ref[0]
    m1 = masks_ref[1]
    m2 = masks_ref[2]
    # Gumbel-masked weighted sum (op2 = identity), f32 epilogue (v5e-safe).
    o_ref[...] = m0 * y3 + m1 * y5 + m2 * xid_ref[...]


# ------------------------------ JAX glue -------------------------------------
def _banded_weight(w, k, W, C, Cout):
    """Fold the conv over W into a (5*(W+4)*C, W*Cout) banded matmul weight."""
    off = 2 - k // 2                      # offset of the k-window inside the 5-window
    Wt = jnp.zeros((5, W + 4, C, W, Cout), dtype=w.dtype)
    for wcol in range(W):
        Wt = Wt.at[off:off + k, wcol + off:wcol + off + k, :, wcol, :].set(w)
    return Wt.reshape(5 * (W + 4) * C, W * Cout)


@functools.partial(jax.jit, static_argnames=("tm",))
def mixed_operation_forward(x_nchw, thetas, w3, b3, w5, b5,
                            temperature, latency_to_accumulate, gumbel_key,
                            tm=16):
    B, C, H, W = x_nchw.shape
    Cout = w3.shape[-1]
    assert C == Cout, "identity branch requires Cin == Cout (stride 1)"
    Mrow = B * H                                     # output rows (lane-dense layout)
    assert Mrow % tm == 0, "B*H must be a multiple of the row tile"
    WC = W * Cout                                    # lane-dense output width
    K = 5 * (W + 4) * C
    Kpad = ((K + 127) // 128) * 128                  # aligned K for unmasked loads

    # gumbel_softmax(thetas, temperature) — matches F.gumbel_softmax (soft).
    u = jax.random.uniform(gumbel_key, thetas.shape, minval=1e-10, maxval=1.0)
    g = -jnp.log(-jnp.log(u))
    masks = jax.nn.softmax((thetas + g) / temperature).astype(jnp.float32)

    # NCHW -> NHWC; build the H-halo patch slab (5x row duplication only).
    x_nhwc = jnp.transpose(x_nchw, (0, 2, 3, 1))                  # (B,H,W,C)
    xpad = jnp.pad(x_nhwc, ((0, 0), (2, 2), (2, 2), (0, 0)))      # (B,H+4,W+4,C)
    taps = [xpad[:, dy:dy + H, :, :] for dy in range(5)]
    lhs = jnp.stack(taps, axis=2).reshape(Mrow, K)                # (B*H, K)
    lhs = jnp.pad(lhs, ((0, 0), (0, Kpad - K))).astype(jnp.bfloat16)

    # Fused banded conv weight: cols [0:WC] = 3x3 branch, [WC:2WC] = 5x5 branch.
    wt3 = _banded_weight(w3, 3, W, C, Cout)
    wt5 = _banded_weight(w5, 5, W, C, Cout)
    wfull = jnp.concatenate([wt3, wt5], axis=1)                   # (K, 2*WC)
    wfull = jnp.pad(wfull, ((0, Kpad - K), (0, 0))).astype(jnp.bfloat16)
    bfull = jnp.concatenate([jnp.tile(b3, W), jnp.tile(b5, W)]).reshape(1, 2 * WC)
    bfull = bfull.astype(jnp.float32)

    # Identity branch, lane-dense (B*H, W*C) == output layout since C == Cout.
    xid = x_nhwc.reshape(Mrow, WC).astype(jnp.float32)

    cost = pl.CostEstimate(
        flops=2 * Mrow * Kpad * 2 * WC + 6 * Mrow * WC,
        transcendentals=0,
        bytes_accessed=(lhs.size * 2 + wfull.size * 2 + bfull.size * 4
                        + xid.size * 4 + Mrow * WC * 4))

    out_flat = pl.pallas_call(
        _mixed_kernel,
        out_shape=jax.ShapeDtypeStruct((Mrow, WC), jnp.float32),
        grid=(Mrow // tm,),
        in_specs=[
            pl.BlockSpec(memory_space=pltpu.MemorySpace.SMEM),     # masks
            pl.BlockSpec((tm, Kpad), lambda i: (i, 0)),            # patch slab (bf16)
            pl.BlockSpec((Kpad, 2 * WC), lambda i: (0, 0)),        # fused weight (resident)
            pl.BlockSpec((1, 2 * WC), lambda i: (0, 0)),           # fused bias (resident)
            pl.BlockSpec((tm, WC), lambda i: (i, 0)),              # identity (lane dense)
        ],
        out_specs=pl.BlockSpec((tm, WC), lambda i: (i, 0)),        # lane-dense output
        compiler_params=pltpu.CompilerParams(
            dimension_semantics=("parallel",),
            vmem_limit_bytes=32 * 1024 * 1024),
        cost_estimate=cost,
    )(masks, lhs, wfull, bfull, xid)

    out_nchw = jnp.transpose(out_flat.reshape(B, H, W, Cout), (0, 3, 1, 2))
    # TODO(synk): latency is a hard-coded +10 in the reference module, not a
    # mask-weighted per-op latency sum.
    return out_nchw, latency_to_accumulate + 10.0, masks


# ------------------------------ reference ------------------------------------
def _reference(x_nchw, w3, b3, w5, b5, masks):
    # Conv branches use bf16-rounded operands (matching the kernel's bf16 MXU
    # inputs); the identity branch stays full f32, as in the kernel.
    xq = x_nchw.astype(jnp.bfloat16).astype(jnp.float32)

    def conv_relu6(x, w, b):
        wq = w.astype(jnp.bfloat16).astype(jnp.float32)
        w_oihw = jnp.transpose(wq, (3, 2, 0, 1))
        y = lax.conv_general_dilated(
            x, w_oihw, (1, 1), "SAME",
            dimension_numbers=("NCHW", "OIHW", "NCHW"),
            precision=lax.Precision.HIGHEST)
        return jnp.clip(y + b.reshape(1, -1, 1, 1), 0.0, 6.0)

    y3 = conv_relu6(xq, w3, b3)
    y5 = conv_relu6(xq, w5, b5)
    return masks[0] * y3 + masks[1] * y5 + masks[2] * x_nchw


# -------------------------------- main ----------------------------------------
if __name__ == "__main__":
    B, C, H, W = 2, 8, 16, 16        # Cin == Cout so the identity branch is valid
    Cout = C
    n_ops = 3

    key = jax.random.PRNGKey(0)
    kx, kw3, kb3, kw5, kb5, kg = jax.random.split(key, 6)

    x = jax.random.normal(kx, (B, C, H, W), dtype=jnp.float32)
    w3 = 0.1 * jax.random.normal(kw3, (3, 3, C, Cout), dtype=jnp.float32)
    b3 = 0.1 * jax.random.normal(kb3, (Cout,), dtype=jnp.float32)
    w5 = 0.05 * jax.random.normal(kw5, (5, 5, C, Cout), dtype=jnp.float32)
    b5 = 0.1 * jax.random.normal(kb5, (Cout,), dtype=jnp.float32)
    thetas = jnp.full((n_ops,), 1.0 / n_ops, dtype=jnp.float32)   # nn.Parameter init

    temperature = 5.0
    latency_in = jnp.float32(0.0)

    # tm=16 -> grid=(2,), keeping >=2 parallel steps for v7x megacore sharding.
    out, latency_out, masks = mixed_operation_forward(
        x, thetas, w3, b3, w5, b5, temperature, latency_in, kg, tm=16)
    out = jax.block_until_ready(out)
    latency_out = jax.block_until_ready(latency_out)

    ref = _reference(x, w3, b3, w5, b5, masks)
    assert out.shape == (B, Cout, H, W)
    assert jnp.allclose(out, ref, atol=1e-2, rtol=1e-2), "mismatch vs reference"
    assert float(latency_out) == 10.0

    print("KERNEL_OK")
</pallas_src>

<mosaic_0001>
module attributes {stable_mosaic.version = 11 : i64} {
  func.func @_mixed_kernel(%arg0: i32, %arg1: memref<3xf32, #tpu.memory_space<smem>>, %arg2: memref<16x896xbf16, #tpu.memory_space<vmem>>, %arg3: memref<896x256xbf16, #tpu.memory_space<vmem>>, %arg4: memref<1x256xf32, #tpu.memory_space<vmem>>, %arg5: memref<16x128xf32, #tpu.memory_space<vmem>>, %arg6: memref<16x128xf32, #tpu.memory_space<vmem>>) attributes {dimension_semantics = [#tpu.dimension_semantics<parallel>], iteration_bounds = array<i64: 2>, scalar_prefetch = 0 : i64, scratch_operands = 0 : i64, tpu.core_type = #tpu.core_type<tc>, window_params = [{transform_indices = @transform_0, window_bounds = array<i64: 3>}, {transform_indices = @transform_1, window_bounds = array<i64: 16, 896>}, {pipeline_mode = #tpu.pipeline_mode<synchronous>, transform_indices = @transform_2, window_bounds = array<i64: 896, 256>}, {pipeline_mode = #tpu.pipeline_mode<synchronous>, transform_indices = @transform_3, window_bounds = array<i64: 1, 256>}, {transform_indices = @transform_4, window_bounds = array<i64: 16, 128>}, {transform_indices = @transform_5, window_bounds = array<i64: 16, 128>}]} {
    %c0 = arith.constant 0 : index
    %c0_0 = arith.constant 0 : index
    %0 = vector.load %arg2[%c0, %c0_0] : memref<16x896xbf16, #tpu.memory_space<vmem>>, vector<16x896xbf16>
    %c0_1 = arith.constant 0 : index
    %c0_2 = arith.constant 0 : index
    %1 = vector.load %arg3[%c0_1, %c0_2] : memref<896x256xbf16, #tpu.memory_space<vmem>>, vector<896x256xbf16>
    %cst = arith.constant dense<0.000000e+00> : vector<16x256xf32>
    %2 = tpu.matmul %0, %1, %cst {dimension_numbers = #tpu.dot_dimension_numbers<[1], [0], [0], [1], [0, 0, 1, 1], [], []>} : vector<16x896xbf16>, vector<896x256xbf16>, vector<16x256xf32> -> vector<16x256xf32>
    %c0_3 = arith.constant 0 : index
    %c0_4 = arith.constant 0 : index
    %3 = vector.load %arg4[%c0_3, %c0_4] : memref<1x256xf32, #tpu.memory_space<vmem>>, vector<1x256xf32>
    %4 = vector.broadcast %3 : vector<1x256xf32> to vector<16x256xf32>
    %5 = arith.addf %2, %4 : vector<16x256xf32>
    %cst_5 = arith.constant 0.000000e+00 : f32
    %cst_6 = arith.constant 6.000000e+00 : f32
    %6 = vector.broadcast %cst_5 : f32 to vector<16x256xf32>
    %7 = arith.maximumf %6, %5 : vector<16x256xf32>
    %8 = vector.broadcast %cst_6 : f32 to vector<16x256xf32>
    %9 = arith.minimumf %8, %7 : vector<16x256xf32>
    %10 = vector.extract_strided_slice %9 {offsets = [0, 0], sizes = [16, 128], strides = [1, 1]} : vector<16x256xf32> to vector<16x128xf32>
    %11 = vector.extract_strided_slice %9 {offsets = [0, 128], sizes = [16, 128], strides = [1, 1]} : vector<16x256xf32> to vector<16x128xf32>
    %c0_7 = arith.constant 0 : index
    %12 = memref.load %arg1[%c0_7] : memref<3xf32, #tpu.memory_space<smem>>
    %c1 = arith.constant 1 : index
    %13 = memref.load %arg1[%c1] : memref<3xf32, #tpu.memory_space<smem>>
    %c2 = arith.constant 2 : index
    %14 = memref.load %arg1[%c2] : memref<3xf32, #tpu.memory_space<smem>>
    %15 = vector.broadcast %12 : f32 to vector<16x128xf32>
    %16 = arith.mulf %15, %10 : vector<16x128xf32>
    %17 = vector.broadcast %13 : f32 to vector<16x128xf32>
    %18 = arith.mulf %17, %11 : vector<16x128xf32>
    %19 = arith.addf %16, %18 : vector<16x128xf32>
    %c0_8 = arith.constant 0 : index
    %c0_9 = arith.constant 0 : index
    %20 = vector.load %arg5[%c0_8, %c0_9] : memref<16x128xf32, #tpu.memory_space<vmem>>, vector<16x128xf32>
    %21 = vector.broadcast %14 : f32 to vector<16x128xf32>
    %22 = arith.mulf %21, %20 : vector<16x128xf32>
    %23 = arith.addf %19, %22 : vector<16x128xf32>
    %c0_10 = arith.constant 0 : index
    %c0_11 = arith.constant 0 : index
    %24 = vector.load %arg6[%c0_10, %c0_11] : memref<16x128xf32, #tpu.memory_space<vmem>>, vector<16x128xf32>
    tpu.vector_store %arg6[%c0_10, %c0_11], %23 {strides = array<i32>} : memref<16x128xf32, #tpu.memory_space<vmem>>, vector<16x128xf32>,
    return
  }
  func.func @transform_0(%arg0: i32) -> i32 {
    %c0_i32 = arith.constant 0 : i32
    %c0_i32_0 = arith.constant 0 : i32
    return %c0_i32 : i32
  }
  func.func @transform_1(%arg0: i32) -> (i32, i32) {
    %c0_i32 = arith.constant 0 : i32
    %c0_i32_0 = arith.constant 0 : i32
    return %arg0, %c0_i32 : i32, i32
  }
  func.func @transform_2(%arg0: i32) -> (i32, i32) {
    %c0_i32 = arith.constant 0 : i32
    %c0_i32_0 = arith.constant 0 : i32
    %c0_i32_1 = arith.constant 0 : i32
    return %c0_i32, %c0_i32_0 : i32, i32
  }
  func.func @transform_3(%arg0: i32) -> (i32, i32) {
    %c0_i32 = arith.constant 0 : i32
    %c0_i32_0 = arith.constant 0 : i32
    %c0_i32_1 = arith.constant 0 : i32
    return %c0_i32, %c0_i32_0 : i32, i32
  }
  func.func @transform_4(%arg0: i32) -> (i32, i32) {
    %c0_i32 = arith.constant 0 : i32
    %c0_i32_0 = arith.constant 0 : i32
    return %arg0, %c0_i32 : i32, i32
  }
  func.func @transform_5(%arg0: i32) -> (i32, i32) {
    %c0_i32 = arith.constant 0 : i32
    %c0_i32_0 = arith.constant 0 : i32
    return %arg0, %c0_i32 : i32, i32
  }
}

</mosaic_0001>

<llo_original>
// kernel: tile.13
$region0: #{tile.13}
  #allocation0 [shape = 's32[1]{0}', space=sflag, size = 0x4, scoped, tag = 'scoped memory for tile.13']
  %s0 = inlined_call_operand.vmem [shape: f32[8], index: 0, kind: input, shape index: {}]
  %s1 = inlined_call_operand.vmem [shape: f32[16,8], index: 1, kind: output, shape index: {}]
  // Predicated region
  $region2: #{tile.13} parent=0 // pred_check
    _
  $region3: #{tile.13} parent=0 // pred_check_branch
    %3 = sbr.rel (0) target = $region5
  $region4: #{tile.13} parent=0 // pred_region
    _
  $region5: #{tile.13} parent=0 // pred_fallthru
    _
  %v4 = vld [vmem:[%s0] ss:$0 sm:$0xff]
  %5 = vst [vmem:[%s1] sm:$0xff] %v4
  %s6 = scalar_lea.vmem %s1, 8
  %7 = vst [vmem:[%s6] sm:$0xff] %v4

// kernel: tile.14
$region0: #{tile.14}
  %s0 = inlined_call_operand.vmem [shape: f32[16,8], index: 0, kind: input, shape index: {}]
  %s1 = inlined_call_operand.vmem [shape: f32[128], index: 1, kind: output, shape index: {}]
  $region1: #{tile.14} parent=0
    #allocation0 [shape = 'u8[4096]{0}', space=vmem, size = 0x1000, scoped, tag = 'scoped mem for output reshape']
    %v2 = vld [vmem:[%s0] sm:$0x1]
    %vm3 = vcmask 64512
    %4 = vst.msk [vmem:[#allocation0] sm:$0x1] %vm3, %v2
    %s5 = scalar_lea.vmem %s0, 15
    %v6 = vld [vmem:[%s5] sm:$0x1]
    %7 = vrot.lane.b32.xlu0 %v6, 120
    %v8 = vpop.permute.xlu0 %7
    %vm9 = vcmask 1048512
    %10 = vst.msk [vmem:[#allocation0] sm:$0x1] %vm9, %v8
    %s11 = scalar_lea.vmem %s0, 14
    %v12 = vld [vmem:[%s11] sm:$0x1]
    %13 = vrot.lane.b32.xlu0 %v12, 112
    %v14 = vpop.permute.xlu0 %13
    %vm15 = vcmask 982912
    %16 = vst.msk [vmem:[#allocation0] sm:$0x1] %vm15, %v14
    %s17 = scalar_lea.vmem %s0, 13
    %v18 = vld [vmem:[%s17] sm:$0x1]
    %19 = vrot.lane.b32.xlu0 %v18, 104
    %v20 = vpop.permute.xlu0 %19
    %vm21 = vcmask 917312
    %22 = vst.msk [vmem:[#allocation0] sm:$0x1] %vm21, %v20
    %s23 = scalar_lea.vmem %s0, 12
    %v24 = vld [vmem:[%s23] sm:$0x1]
    %25 = vrot.lane.b32.xlu0 %v24, 96
    %v26 = vpop.permute.xlu0 %25
    %vm27 = vcmask 851712
    %28 = vst.msk [vmem:[#allocation0] sm:$0x1] %vm27, %v26
    %s29 = scalar_lea.vmem %s0, 11
    %v30 = vld [vmem:[%s29] sm:$0x1]
    %31 = vrot.lane.b32.xlu0 %v30, 88
    %v32 = vpop.permute.xlu0 %31
    %vm33 = vcmask 786112
    %34 = vst.msk [vmem:[#allocation0] sm:$0x1] %vm33, %v32
    %s35 = scalar_lea.vmem %s0, 10
    %v36 = vld [vmem:[%s35] sm:$0x1]
    %37 = vrot.lane.b32.xlu0 %v36, 80
    %v38 = vpop.permute.xlu0 %37
    %vm39 = vcmask 720512
    %40 = vst.msk [vmem:[#allocation0] sm:$0x1] %vm39, %v38
    %s41 = scalar_lea.vmem %s0, 9
    %v42 = vld [vmem:[%s41] sm:$0x1]
    %43 = vrot.lane.b32.xlu0 %v42, 72
    %v44 = vpop.permute.xlu0 %43
    %vm45 = vcmask 654912
    %46 = vst.msk [vmem:[#allocation0] sm:$0x1] %vm45, %v44
    %s47 = scalar_lea.vmem %s0, 8
    %v48 = vld [vmem:[%s47] sm:$0x1]
    %49 = vrot.lane.b32.xlu0 %v48, 64
    %v50 = vpop.permute.xlu0 %49
    %vm51 = vcmask 589312
    %52 = vst.msk [vmem:[#allocation0] sm:$0x1] %vm51, %v50
    %s53 = scalar_lea.vmem %s0, 7
    %v54 = vld [vmem:[%s53] sm:$0x1]
    %55 = vrot.lane.b32.xlu0 %v54, 56
    %v56 = vpop.permute.xlu0 %55
    %vm57 = vcmask 523712
    %58 = vst.msk [vmem:[#allocation0] sm:$0x1] %vm57, %v56
    %s59 = scalar_lea.vmem %s0, 6
    %v60 = vld [vmem:[%s59] sm:$0x1]
    %61 = vrot.lane.b32.xlu0 %v60, 48
    %v62 = vpop.permute.xlu0 %61
    %vm63 = vcmask 458112
    %64 = vst.msk [vmem:[#allocation0] sm:$0x1] %vm63, %v62
    %s65 = scalar_lea.vmem %s0, 5
    %v66 = vld [vmem:[%s65] sm:$0x1]
    %67 = vrot.lane.b32.xlu0 %v66, 40
    %v68 = vpop.permute.xlu0 %67
    %vm69 = vcmask 392512
    %70 = vst.msk [vmem:[#allocation0] sm:$0x1] %vm69, %v68
    %s71 = scalar_lea.vmem %s0, 4
    %v72 = vld [vmem:[%s71] sm:$0x1]
    %73 = vrot.lane.b32.xlu0 %v72, 32
    %v74 = vpop.permute.xlu0 %73
    %vm75 = vcmask 326912
    %76 = vst.msk [vmem:[#allocation0] sm:$0x1] %vm75, %v74
    %s77 = scalar_lea.vmem %s0, 3
    %v78 = vld [vmem:[%s77] sm:$0x1]
    %79 = vrot.lane.b32.xlu0 %v78, 24
    %v80 = vpop.permute.xlu0 %79
    %vm81 = vcmask 261312
    %82 = vst.msk [vmem:[#allocation0] sm:$0x1] %vm81, %v80
    %s83 = scalar_lea.vmem %s0, 2
    %v84 = vld [vmem:[%s83] sm:$0x1]
    %85 = vrot.lane.b32.xlu0 %v84, 16
    %v86 = vpop.permute.xlu0 %85
    %vm87 = vcmask 195712
    %88 = vst.msk [vmem:[#allocation0] sm:$0x1] %vm87, %v86
    %s89 = scalar_lea.vmem %s0, 1
    %v90 = vld [vmem:[%s89] sm:$0x1]
    %91 = vrot.lane.b32.xlu0 %v90, 8
    %v92 = vpop.permute.xlu0 %91
    %vm93 = vcmask 130112
    %94 = vst.msk [vmem:[#allocation0] sm:$0x1] %vm93, %v92
    %s96 = sshllo.u32 0, 1
    %v98 = vld [vmem:[#allocation0] sm:%s96]
    %s99 = sshllo.u32 0, 1
    %100 = vst [vmem:[%s1] sm:%s99] %v98

// kernel: mixed_operation_forward.1
$region0: #{mixed_operation_forward.1}
  #allocation0 [shape = 'u32[]', space=smem, size = 0x4, offset = 0x4, fixed_abs, tag = 'smem constant byte address 0x4 - core index']
  #allocation1 [shape = 'u32[144,128]{1,0:T(1,128)}', space=vmem, size = 0x12000, scoped, tag = 'internal scratch']
  %s0 = inlined_call_operand.vmem [shape: f32[3], index: 0, kind: input, shape index: {}]
  %s1 = inlined_call_operand.vmem [shape: bf16[32,896], index: 1, kind: input, shape index: {}]
  %s2 = inlined_call_operand.vmem [shape: bf16[896,256], index: 2, kind: input, shape index: {}]
  %s3 = inlined_call_operand.vmem [shape: f32[1,256], index: 3, kind: input, shape index: {}]
  %s4 = inlined_call_operand.vmem [shape: f32[32,128], index: 4, kind: input, shape index: {}]
  %s5 = inlined_call_operand.vmem [shape: f32[32,128], index: 5, kind: output, shape index: {}]
  %s6 = sld [smem:[#allocation0]]
  $region57: #{mixed_operation_forward.1} parent=0
    _
  %s8 = ssub.s32 1, %s6
  %s9 = scalar_select 0, %s8, %s6
  $region1: #{mixed_operation_forward.1} parent=0
    #allocation2 [shape = 'u8[512]{0}', space=smem, size = 0x200, scoped, tag = 'input window, operand 0, single buffered']
    #allocation3 [shape = 's32[2]{0}', space=sflag, size = 0x8, scoped, tag = 'scoped memory for mixed_operation_forward.1']
    %10 = vsyncpa [#allocation3], 0
    loop: start=0, step=1, limit=4
    $region2: #{mixed_operation_forward.1} parent=1 // loop_pre_header
      _
    $region3: #{mixed_operation_forward.1} parent=1 // loop_header
      %s12 = sphi 0, %s16
      %p13 = scmp.ge.s32.totalorder %s12, 4
      %s20 = sphi 0, %s20
      %s22 = sphi 0, %s20
      %s23 = sphi 0, %s22
      %s37 = sphi 0, %s23
      %s43 = sphi 0, %s45
      %s46 = sphi 0, %s43
      %s47 = sphi 0, %s46
      %s63 = sphi 0, %s47
      %s67 = sphi 0, %s67
      %s69 = sphi 0, %s67
      %s70 = sphi 0, %s69
      %s84 = sphi 0, %s70
      %s88 = sphi 0, %s88
      %s90 = sphi 0, %s88
      %s91 = sphi 0, %s90
      %s105 = sphi 0, %s91
      %s111 = sphi 0, %s113
      %s114 = sphi 0, %s111
      %s115 = sphi 0, %s114
      %s131 = sphi 0, %s115
      %s137 = sphi 0, %s139
      %s140 = sphi 0, %s137
      %s141 = sphi 0, %s140
      %s157 = sphi 0, %s141
    $region4: #{mixed_operation_forward.1} parent=1 // loop_header_branch
      %15 = sbr.rel (%p13) target = $region8
    $region5: #{mixed_operation_forward.1} parent=1 // loop_body
      %s17 = ssub.s32 %s12, 1
      %s18 = ssub.s32 %s12, 2
      %s19 = sadd.s32 %s12, 1
      %s21 = sadd.s32 %s20, 1
      %p24 = scmp.eq.s32.totalorder %s12, 1
      %p25 = scmp.ne.s32.totalorder %s20, %s22
      %p26 = scmp.eq.s32.totalorder %s12, 0
      %p27 = por %p25, %p26
      %p28 = scmp.ne.s32.totalorder %s20, %s22
      %p29 = scmp.eq.s32.totalorder %s17, 1
      %p30 = por %p28, %p29
      %p31 = scmp.ne.s32.totalorder %s22, %s23
      %p32 = scmp.eq.s32.totalorder %s17, 0
      %p33 = por %p31, %p32
      %p34 = scmp.ne.s32.totalorder %s22, %s23
      %p35 = scmp.eq.s32.totalorder %s18, 1
      %p36 = por %p34, %p35
      %p38 = scmp.ne.s32.totalorder %s23, %s37
      %p39 = scmp.eq.s32.totalorder %s18, 0
      %p40 = por %p38, %p39
      %s41 = ssub.s32 %s12, %s19
      %p42 = scmp.eq.s32.totalorder %s41, 0
      %s44 = sadd.s32 %s43, 1
      %s45 = scalar_select %p42, %s43, %s44
      %p48 = pneg %p42
      %p49 = scmp.eq.s32.totalorder %s12, 1
      %p50 = por %p48, %p49
      %p51 = scmp.ne.s32.totalorder %s43, %s46
      %p52 = scmp.eq.s32.totalorder %s12, 0
      %p53 = por %p51, %p52
      %p54 = scmp.ne.s32.totalorder %s43, %s46
      %p55 = scmp.eq.s32.totalorder %s17, 1
      %p56 = por %p54, %p55
      %p57 = scmp.ne.s32.totalorder %s46, %s47
      %p58 = scmp.eq.s32.totalorder %s17, 0
      %p59 = por %p57, %p58
      %p60 = scmp.ne.s32.totalorder %s46, %s47
      %p61 = scmp.eq.s32.totalorder %s18, 1
      %p62 = por %p60, %p61
      %p64 = scmp.ne.s32.totalorder %s47, %s63
      %p65 = scmp.eq.s32.totalorder %s18, 0
      %p66 = por %p64, %p65
      %s68 = sadd.s32 %s67, 1
      %p71 = scmp.eq.s32.totalorder %s12, 1
      %p72 = scmp.ne.s32.totalorder %s67, %s69
      %p73 = scmp.eq.s32.totalorder %s12, 0
      %p74 = por %p72, %p73
      %p75 = scmp.ne.s32.totalorder %s67, %s69
      %p76 = scmp.eq.s32.totalorder %s17, 1
      %p77 = por %p75, %p76
      %p78 = scmp.ne.s32.totalorder %s69, %s70
      %p79 = scmp.eq.s32.totalorder %s17, 0
      %p80 = por %p78, %p79
      %p81 = scmp.ne.s32.totalorder %s69, %s70
      %p82 = scmp.eq.s32.totalorder %s18, 1
      %p83 = por %p81, %p82
      %p85 = scmp.ne.s32.totalorder %s70, %s84
      %p86 = scmp.eq.s32.totalorder %s18, 0
      %p87 = por %p85, %p86
      %s89 = sadd.s32 %s88, 1
      %p92 = scmp.eq.s32.totalorder %s12, 1
      %p93 = scmp.ne.s32.totalorder %s88, %s90
      %p94 = scmp.eq.s32.totalorder %s12, 0
      %p95 = por %p93, %p94
      %p96 = scmp.ne.s32.totalorder %s88, %s90
      %p97 = scmp.eq.s32.totalorder %s17, 1
      %p98 = por %p96, %p97
      %p99 = scmp.ne.s32.totalorder %s90, %s91
      %p100 = scmp.eq.s32.totalorder %s17, 0
      %p101 = por %p99, %p100
      %p102 = scmp.ne.s32.totalorder %s90, %s91
      %p103 = scmp.eq.s32.totalorder %s18, 1
      %p104 = por %p102, %p103
      %p106 = scmp.ne.s32.totalorder %s91, %s105
      %p107 = scmp.eq.s32.totalorder %s18, 0
      %p108 = por %p106, %p107
      %s109 = ssub.s32 %s12, %s19
      %p110 = scmp.eq.s32.totalorder %s109, 0
      %s112 = sadd.s32 %s111, 1
      %s113 = scalar_select %p110, %s111, %s112
      %p116 = pneg %p110
      %p117 = scmp.eq.s32.totalorder %s12, 1
      %p118 = por %p116, %p117
      %p119 = scmp.ne.s32.totalorder %s111, %s114
      %p120 = scmp.eq.s32.totalorder %s12, 0
      %p121 = por %p119, %p120
      %p122 = scmp.ne.s32.totalorder %s111, %s114
      %p123 = scmp.eq.s32.totalorder %s17, 1
      %p124 = por %p122, %p123
      %p125 = scmp.ne.s32.totalorder %s114, %s115
      %p126 = scmp.eq.s32.totalorder %s17, 0
      %p127 = por %p125, %p126
      %p128 = scmp.ne.s32.totalorder %s114, %s115
      %p129 = scmp.eq.s32.totalorder %s18, 1
      %p130 = por %p128, %p129
      %p132 = scmp.ne.s32.totalorder %s115, %s131
      %p133 = scmp.eq.s32.totalorder %s18, 0
      %p134 = por %p132, %p133
      %s135 = ssub.s32 %s12, %s19
      %p136 = scmp.eq.s32.totalorder %s135, 0
      %s138 = sadd.s32 %s137, 1
      %s139 = scalar_select %p136, %s137, %s138
      %p142 = pneg %p136
      %p143 = scmp.eq.s32.totalorder %s12, 1
      %p144 = por %p142, %p143
      %p145 = scmp.ne.s32.totalorder %s137, %s140
      %p146 = scmp.eq.s32.totalorder %s12, 0
      %p147 = por %p145, %p146
      %p148 = scmp.ne.s32.totalorder %s137, %s140
      %p149 = scmp.eq.s32.totalorder %s17, 1
      %p150 = por %p148, %p149
      %p151 = scmp.ne.s32.totalorder %s140, %s141
      %p152 = scmp.eq.s32.totalorder %s17, 0
      %p153 = por %p151, %p152
      %p154 = scmp.ne.s32.totalorder %s140, %s141
      %p155 = scmp.eq.s32.totalorder %s18, 1
      %p156 = por %p154, %p155
      %p158 = scmp.ne.s32.totalorder %s141, %s157
      %p159 = scmp.eq.s32.totalorder %s18, 0
      %p160 = por %p158, %p159
      %p161 = scmp.le.s32.totalorder 1, %s12
      %p162 = scmp.lt.s32.totalorder %s12, 3
      %p163 = pnand %p161, %p162
      %p164 = pneg %p163
      // Predicated region
      $region9: #{mixed_operation_forward.1} parent=5 // pred_check
        _
      $region10: #{mixed_operation_forward.1} parent=5 // pred_check_branch
        %166 = sbr.rel (%p163) target = $region12
      $region11: #{mixed_operation_forward.1} parent=5 // pred_region
        %s167 = ssub.s32 %s12, 1
        // Predicated region
        $region13: #{mixed_operation_forward.1} parent=11 // pred_check
          %p168 = pneg %p33
        $region14: #{mixed_operation_forward.1} parent=11 // pred_check_branch
          %170 = sbr.rel (%p168) target = $region16
        $region15: #{mixed_operation_forward.1} parent=11 // pred_region
          %s172 = ssub.s32 16, 16
          %173 = vsyncadd [#allocation3], %s172
          %s175 = sshll.u32 %s0, 4
          %s176 = int_to_ptr.vmem [resolvable:$true] %s175
          %178 = dma.vmem_to_smem %s176, 16, [#allocation2], [#allocation3]
        $region16: #{mixed_operation_forward.1} parent=11 // pred_fallthru
          _
        // Predicated region
        $region17: #{mixed_operation_forward.1} parent=11 // pred_check
          %p179 = pneg %p80
        $region18: #{mixed_operation_forward.1} parent=11 // pred_check_branch
          %181 = sbr.rel (%p179) target = $region20
        $region19: #{mixed_operation_forward.1} parent=11 // pred_region
          _
        $region20: #{mixed_operation_forward.1} parent=11 // pred_fallthru
          _
        // Predicated region
        $region21: #{mixed_operation_forward.1} parent=11 // pred_check
          %p182 = pneg %p101
        $region22: #{mixed_operation_forward.1} parent=11 // pred_check_branch
          %184 = sbr.rel (%p182) target = $region24
        $region23: #{mixed_operation_forward.1} parent=11 // pred_region
          _
        $region24: #{mixed_operation_forward.1} parent=11 // pred_fallthru
          _
      $region12: #{mixed_operation_forward.1} parent=5 // pred_fallthru
        _
      %p185 = scmp.lt.s32.totalorder %s12, 2
      // Predicated region
      $region25: #{mixed_operation_forward.1} parent=5 // pred_check
        %p186 = pneg %p185
      $region26: #{mixed_operation_forward.1} parent=5 // pred_check_branch
        %188 = sbr.rel (%p186) target = $region28
      $region27: #{mixed_operation_forward.1} parent=5 // pred_region
        // Predicated region
        $region29: #{mixed_operation_forward.1} parent=27 // pred_check
          %p189 = pneg %p53
        $region30: #{mixed_operation_forward.1} parent=27 // pred_check_branch
          %191 = sbr.rel (%p189) target = $region32
        $region31: #{mixed_operation_forward.1} parent=27 // pred_region
          %s192 = smul.u32 2, %s12
          %p193 = scmp.lt.s32.totalorder %s192, 3
          %s194 = scalar_select %p193, %s192, 3
          %s195 = smul.addr %s194, 7
          %s196 = smul.addr %s195, 4
          %s197 = scalar_lea.vmem %s1, %s196
          %s198 = smul.u32 2, %s12
        $region32: #{mixed_operation_forward.1} parent=27 // pred_fallthru
          _
        // Predicated region
        $region33: #{mixed_operation_forward.1} parent=27 // pred_check
          %p199 = pneg %p121
        $region34: #{mixed_operation_forward.1} parent=27 // pred_check_branch
          %201 = sbr.rel (%p199) target = $region36
        $region35: #{mixed_operation_forward.1} parent=27 // pred_region
          %s202 = smul.u32 2, %s12
          %p203 = scmp.lt.s32.totalorder %s202, 3
          %s204 = scalar_select %p203, %s202, 3
          %s205 = smul.addr %s204, 8
          %s206 = scalar_lea.vmem %s4, %s205
          %s207 = smul.u32 2, %s12
        $region36: #{mixed_operation_forward.1} parent=27 // pred_fallthru
          _
      $region28: #{mixed_operation_forward.1} parent=5 // pred_fallthru
        _
      %p208 = scmp.le.s32.totalorder 1, %s12
      %p209 = scmp.lt.s32.totalorder %s12, 3
      %p210 = pnand %p208, %p209
      %p211 = pneg %p210
      // Predicated region
      $region37: #{mixed_operation_forward.1} parent=5 // pred_check
        _
      $region38: #{mixed_operation_forward.1} parent=5 // pred_check_branch
        %213 = sbr.rel (%p210) target = $region40
      $region39: #{mixed_operation_forward.1} parent=5 // pred_region
        %s214 = ssub.s32 %s12, 1
        // Predicated region
        $region41: #{mixed_operation_forward.1} parent=39 // pred_check
          %p215 = pneg %p33
        $region42: #{mixed_operation_forward.1} parent=39 // pred_check_branch
          %217 = sbr.rel (%p215) target = $region44
        $region43: #{mixed_operation_forward.1} parent=39 // pred_region
          %218 = dma.done [#allocation3], 16
        $region44: #{mixed_operation_forward.1} parent=39 // pred_fallthru
          _
        %219 = sfence
        %p220 = pneg %p33
        %p221 = pneg %p30
        %s222 = smul.u32 2, %s17
        %p223 = scmp.lt.s32.totalorder %s222, 3
        %s224 = scalar_select %p223, %s222, 3
        %s225 = smul.addr %s224, 7
        %s226 = smul.addr %s225, 4
        %s227 = scalar_lea.vmem %s1, %s226
        %p228 = pneg %p59
        %p229 = pneg %p56
        %p230 = pneg %p80
        %p231 = pneg %p77
        %p232 = pneg %p101
        %p233 = pneg %p98
        %s234 = smul.u32 2, %s17
        %p235 = scmp.lt.s32.totalorder %s234, 3
        %s236 = scalar_select %p235, %s234, 3
        %s237 = smul.addr %s236, 8
        %s238 = scalar_lea.vmem %s4, %s237
        %p239 = pneg %p127
        %p240 = pneg %p124
        %p241 = pneg %p153
        %p242 = pneg %p150
        %s243 = smul.u32 2, %s17
        %p244 = scmp.lt.s32.totalorder %s243, 3
        %s245 = scalar_select %p244, %s243, 3
        %s246 = smul.addr %s245, 8
        %s247 = scalar_lea.vmem %s5, %s246
        %s248 = smul.u32 2, %s17
        %p249 = scmp.lt.s32.totalorder %s248, 3
        %s250 = scalar_select %p249, %s248, 3
        %s251 = smul.addr %s250, 7
        %s252 = smul.addr %s251, 4
        %s253 = scalar_lea.vmem %s1, %s252
        %s254 = smul.u32 2, %s17
        %s255 = smul.u32 2, %s17
        %p256 = scmp.lt.s32.totalorder %s255, 3
        %s257 = scalar_select %p256, %s255, 3
        %s258 = smul.addr %s257, 8
        %s259 = scalar_lea.vmem %s4, %s258
        %s260 = smul.u32 2, %s17
        %s261 = smul.u32 2, %s17
        %p262 = scmp.lt.s32.totalorder %s261, 3
        %s263 = scalar_select %p262, %s261, 3
        %s264 = smul.addr %s263, 8
        %s265 = scalar_lea.vmem %s5, %s264
        %s266 = smul.u32 2, %s17
        %v268 = vld [vmem:[%s253] sm:$0xff]
        %v269 = vld [vmem:[%s253 + $0x8] sm:$0xff]
        %v270 = vld [vmem:[%s253 + $0x10] sm:$0xff]
        %v271 = vld [vmem:[%s253 + $0x18] sm:$0xf]
        %v272 = vld [vmem:[%s253 + $0x1c] sm:$0xff]
        %v273 = vld [vmem:[%s253 + $0x24] sm:$0xff]
        %v274 = vld [vmem:[%s253 + $0x2c] sm:$0xff]
        %v275 = vld [vmem:[%s253 + $0x34] sm:$0xf]
        %v276 = vld [vmem:[%s2] sm:$0xff]
        %v277 = vld [vmem:[%s2 + $0x8] sm:$0xff]
        %v278 = vld [vmem:[%s2 + $0x10] sm:$0xff]
        %v279 = vld [vmem:[%s2 + $0x18] sm:$0xff]
        %v280 = vld [vmem:[%s2 + $0x20] sm:$0xff]
        %v281 = vld [vmem:[%s2 + $0x28] sm:$0xff]
        %v282 = vld [vmem:[%s2 + $0x30] sm:$0xff]
        %v283 = vld [vmem:[%s2 + $0x38] sm:$0xff]
        %v284 = vld [vmem:[%s2 + $0x40] sm:$0xff]
        %v285 = vld [vmem:[%s2 + $0x48] sm:$0xff]
        %v286 = vld [vmem:[%s2 + $0x50] sm:$0xff]
        %v287 = vld [vmem:[%s2 + $0x58] sm:$0xff]
        %v288 = vld [vmem:[%s2 + $0x60] sm:$0xff]
        %v289 = vld [vmem:[%s2 + $0x68] sm:$0xff]
        %v290 = vld [vmem:[%s2 + $0x70] sm:$0xff]
        %v291 = vld [vmem:[%s2 + $0x78] sm:$0xff]
        %v292 = vld [vmem:[%s2 + $0x80] sm:$0xff]
        %v293 = vld [vmem:[%s2 + $0x88] sm:$0xff]
        %v294 = vld [vmem:[%s2 + $0x90] sm:$0xff]
        %v295 = vld [vmem:[%s2 + $0x98] sm:$0xff]
        %v296 = vld [vmem:[%s2 + $0xa0] sm:$0xff]
        %v297 = vld [vmem:[%s2 + $0xa8] sm:$0xff]
        %v298 = vld [vmem:[%s2 + $0xb0] sm:$0xff]
        %v299 = vld [vmem:[%s2 + $0xb8] sm:$0xff]
        %v300 = vld [vmem:[%s2 + $0xc0] sm:$0xff]
        %v301 = vld [vmem:[%s2 + $0xc8] sm:$0xff]
        %v302 = vld [vmem:[%s2 + $0xd0] sm:$0xff]
        %v303 = vld [vmem:[%s2 + $0xd8] sm:$0xff]
        %v304 = vld [vmem:[%s2 + $0xe0] sm:$0xff]
        %v305 = vld [vmem:[%s2 + $0xe8] sm:$0xff]
        %v306 = vld [vmem:[%s2 + $0xf0] sm:$0xff]
        %v307 = vld [vmem:[%s2 + $0xf8] sm:$0xff]
        %v308 = vld [vmem:[%s2 + $0x100] sm:$0xff]
        %v309 = vld [vmem:[%s2 + $0x108] sm:$0xff]
        %v310 = vld [vmem:[%s2 + $0x110] sm:$0xff]
        %v311 = vld [vmem:[%s2 + $0x118] sm:$0xff]
        %v312 = vld [vmem:[%s2 + $0x120] sm:$0xff]
        %v313 = vld [vmem:[%s2 + $0x128] sm:$0xff]
        %v314 = vld [vmem:[%s2 + $0x130] sm:$0xff]
        %v315 = vld [vmem:[%s2 + $0x138] sm:$0xff]
        %v316 = vld [vmem:[%s2 + $0x140] sm:$0xff]
        %v317 = vld [vmem:[%s2 + $0x148] sm:$0xff]
        %v318 = vld [vmem:[%s2 + $0x150] sm:$0xff]
        %v319 = vld [vmem:[%s2 + $0x158] sm:$0xff]
        %v320 = vld [vmem:[%s2 + $0x160] sm:$0xff]
        %v321 = vld [vmem:[%s2 + $0x168] sm:$0xff]
        %v322 = vld [vmem:[%s2 + $0x170] sm:$0xff]
        %v323 = vld [vmem:[%s2 + $0x178] sm:$0xff]
        %v324 = vld [vmem:[%s2 + $0x180] sm:$0xff]
        %v325 = vld [vmem:[%s2 + $0x188] sm:$0xff]
        %v326 = vld [vmem:[%s2 + $0x190] sm:$0xff]
        %v327 = vld [vmem:[%s2 + $0x198] sm:$0xff]
        %v328 = vld [vmem:[%s2 + $0x1a0] sm:$0xff]
        %v329 = vld [vmem:[%s2 + $0x1a8] sm:$0xff]
        %v330 = vld [vmem:[%s2 + $0x1b0] sm:$0xff]
        %v331 = vld [vmem:[%s2 + $0x1b8] sm:$0xff]
        %v332 = vld [vmem:[%s2 + $0x1c0] sm:$0xff]
        %v333 = vld [vmem:[%s2 + $0x1c8] sm:$0xff]
        %v334 = vld [vmem:[%s2 + $0x1d0] sm:$0xff]
        %v335 = vld [vmem:[%s2 + $0x1d8] sm:$0xff]
        %v336 = vld [vmem:[%s2 + $0x1e0] sm:$0xff]
        %v337 = vld [vmem:[%s2 + $0x1e8] sm:$0xff]
        %v338 = vld [vmem:[%s2 + $0x1f0] sm:$0xff]
        %v339 = vld [vmem:[%s2 + $0x1f8] sm:$0xff]
        %v340 = vld [vmem:[%s2 + $0x200] sm:$0xff]
        %v341 = vld [vmem:[%s2 + $0x208] sm:$0xff]
        %v342 = vld [vmem:[%s2 + $0x210] sm:$0xff]
        %v343 = vld [vmem:[%s2 + $0x218] sm:$0xff]
        %v344 = vld [vmem:[%s2 + $0x220] sm:$0xff]
        %v345 = vld [vmem:[%s2 + $0x228] sm:$0xff]
        %v346 = vld [vmem:[%s2 + $0x230] sm:$0xff]
        %v347 = vld [vmem:[%s2 + $0x238] sm:$0xff]
        %v348 = vld [vmem:[%s2 + $0x240] sm:$0xff]
        %v349 = vld [vmem:[%s2 + $0x248] sm:$0xff]
        %v350 = vld [vmem:[%s2 + $0x250] sm:$0xff]
        %v351 = vld [vmem:[%s2 + $0x258] sm:$0xff]
        %v352 = vld [vmem:[%s2 + $0x260] sm:$0xff]
        %v353 = vld [vmem:[%s2 + $0x268] sm:$0xff]
        %v354 = vld [vmem:[%s2 + $0x270] sm:$0xff]
        %v355 = vld [vmem:[%s2 + $0x278] sm:$0xff]
        %v356 = vld [vmem:[%s2 + $0x280] sm:$0xff]
        %v357 = vld [vmem:[%s2 + $0x288] sm:$0xff]
        %v358 = vld [vmem:[%s2 + $0x290] sm:$0xff]
        %v359 = vld [vmem:[%s2 + $0x298] sm:$0xff]
        %v360 = vld [vmem:[%s2 + $0x2a0] sm:$0xff]
        %v361 = vld [vmem:[%s2 + $0x2a8] sm:$0xff]
        %v362 = vld [vmem:[%s2 + $0x2b0] sm:$0xff]
        %v363 = vld [vmem:[%s2 + $0x2b8] sm:$0xff]
        %v364 = vld [vmem:[%s2 + $0x2c0] sm:$0xff]
        %v365 = vld [vmem:[%s2 + $0x2c8] sm:$0xff]
        %v366 = vld [vmem:[%s2 + $0x2d0] sm:$0xff]
        %v367 = vld [vmem:[%s2 + $0x2d8] sm:$0xff]
        %v368 = vld [vmem:[%s2 + $0x2e0] sm:$0xff]
        %v369 = vld [vmem:[%s2 + $0x2e8] sm:$0xff]
        %v370 = vld [vmem:[%s2 + $0x2f0] sm:$0xff]
        %v371 = vld [vmem:[%s2 + $0x2f8] sm:$0xff]
        %v372 = vld [vmem:[%s2 + $0x300] sm:$0xff]
        %v373 = vld [vmem:[%s2 + $0x308] sm:$0xff]
        %v374 = vld [vmem:[%s2 + $0x310] sm:$0xff]
        %v375 = vld [vmem:[%s2 + $0x318] sm:$0xff]
        %v376 = vld [vmem:[%s2 + $0x320] sm:$0xff]
        %v377 = vld [vmem:[%s2 + $0x328] sm:$0xff]
        %v378 = vld [vmem:[%s2 + $0x330] sm:$0xff]
        %v379 = vld [vmem:[%s2 + $0x338] sm:$0xff]
        %v380 = vld [vmem:[%s2 + $0x340] sm:$0xff]
        %v381 = vld [vmem:[%s2 + $0x348] sm:$0xff]
        %v382 = vld [vmem:[%s2 + $0x350] sm:$0xff]
        %v383 = vld [vmem:[%s2 + $0x358] sm:$0xff]
        %v384 = vld [vmem:[%s2 + $0x360] sm:$0xff]
        %v385 = vld [vmem:[%s2 + $0x368] sm:$0xff]
        %v386 = vld [vmem:[%s2 + $0x370] sm:$0xff]
        %v387 = vld [vmem:[%s2 + $0x378] sm:$0xff]
        %v388 = vld [vmem:[%s3] sm:$0x3]
        %v390 = vlaneseq
        %v391 = vshrl.u32 %v390, 7
        %v392 = vsub.s32 0, %v391
        %v393 = vrot.slane %v388, %v392
        %v394 = vlaneseq
        %v395 = vshrl.u32 %v394, 7
        %v396 = vsub.s32 1, %v395
        %v397 = vrot.slane %v388, %v396
        %v408 = vunpack.c.l.b16 %v268
        %v409 = vunpack.c.h.b16 %v268
        %v410 = vunpack.c.l.b16 %v269
        %v411 = vunpack.c.h.b16 %v269
        %v412 = vunpack.c.l.b16 %v270
        %v413 = vunpack.c.h.b16 %v270
        %v414 = vunpack.c.l.b16 %v271
        %v415 = vunpack.c.l.b16 %v272
        %v416 = vunpack.c.h.b16 %v272
        %v417 = vunpack.c.l.b16 %v273
        %v418 = vunpack.c.h.b16 %v273
        %v419 = vunpack.c.l.b16 %v274
        %v420 = vunpack.c.h.b16 %v274
        %v421 = vunpack.c.l.b16 %v275
        %v422 = vpack.c.b16 %v415, %v408
        %v423 = vpack.c.b16 %v416, %v409
        %v424 = vpack.c.b16 %v417, %v410
        %v425 = vpack.c.b16 %v418, %v411
        %v426 = vpack.c.b16 %v419, %v412
        %v427 = vpack.c.b16 %v420, %v413
        %v428 = vpack.c.b16 %v421, %v414
        %v548 = vunpack.c.l.b16 %v276
        %v549 = vunpack.c.h.b16 %v276
        %v550 = vunpack.c.l.b16 %v277
        %v551 = vunpack.c.h.b16 %v277
        %v552 = vunpack.c.l.b16 %v278
        %v553 = vunpack.c.h.b16 %v278
        %v554 = vunpack.c.l.b16 %v279
        %v555 = vunpack.c.h.b16 %v279
        %v556 = vunpack.c.l.b16 %v280
        %v557 = vunpack.c.h.b16 %v280
        %v558 = vunpack.c.l.b16 %v281
        %v559 = vunpack.c.h.b16 %v281
        %v560 = vunpack.c.l.b16 %v282
        %v561 = vunpack.c.h.b16 %v282
        %v562 = vunpack.c.l.b16 %v283
        %v563 = vunpack.c.h.b16 %v283
        %v564 = vunpack.c.l.b16 %v284
        %v565 = vunpack.c.h.b16 %v284
        %v566 = vunpack.c.l.b16 %v285
        %v567 = vunpack.c.h.b16 %v285
        %v568 = vunpack.c.l.b16 %v286
        %v569 = vunpack.c.h.b16 %v286
        %v570 = vunpack.c.l.b16 %v287
        %v571 = vunpack.c.h.b16 %v287
        %v572 = vunpack.c.l.b16 %v288
        %v573 = vunpack.c.h.b16 %v288
        %v574 = vunpack.c.l.b16 %v289
        %v575 = vunpack.c.h.b16 %v289
        %v576 = vunpack.c.l.b16 %v290
        %v577 = vunpack.c.h.b16 %v290
        %v578 = vunpack.c.l.b16 %v291
        %v579 = vunpack.c.h.b16 %v291
        %v580 = vunpack.c.l.b16 %v292
        %v581 = vunpack.c.h.b16 %v292
        %v582 = vunpack.c.l.b16 %v293
        %v583 = vunpack.c.h.b16 %v293
        %v584 = vunpack.c.l.b16 %v294
        %v585 = vunpack.c.h.b16 %v294
        %v586 = vunpack.c.l.b16 %v295
        %v587 = vunpack.c.h.b16 %v295
        %v588 = vunpack.c.l.b16 %v296
        %v589 = vunpack.c.h.b16 %v296
        %v590 = vunpack.c.l.b16 %v297
        %v591 = vunpack.c.h.b16 %v297
        %v592 = vunpack.c.l.b16 %v298
        %v593 = vunpack.c.h.b16 %v298
        %v594 = vunpack.c.l.b16 %v299
        %v595 = vunpack.c.h.b16 %v299
        %v596 = vunpack.c.l.b16 %v300
        %v597 = vunpack.c.h.b16 %v300
        %v598 = vunpack.c.l.b16 %v301
        %v599 = vunpack.c.h.b16 %v301
        %v600 = vunpack.c.l.b16 %v302
        %v601 = vunpack.c.h.b16 %v302
        %v602 = vunpack.c.l.b16 %v303
        %v603 = vunpack.c.h.b16 %v303
        %v604 = vunpack.c.l.b16 %v304
        %v605 = vunpack.c.h.b16 %v304
        %v606 = vunpack.c.l.b16 %v305
        %v607 = vunpack.c.h.b16 %v305
        %v608 = vunpack.c.l.b16 %v306
        %v609 = vunpack.c.h.b16 %v306
        %v610 = vunpack.c.l.b16 %v307
        %v611 = vunpack.c.h.b16 %v307
        %v612 = vunpack.c.l.b16 %v308
        %v613 = vunpack.c.h.b16 %v308
        %v614 = vunpack.c.l.b16 %v309
        %v615 = vunpack.c.h.b16 %v309
        %v616 = vunpack.c.l.b16 %v310
        %v617 = vunpack.c.h.b16 %v310
        %v618 = vunpack.c.l.b16 %v311
        %v619 = vunpack.c.h.b16 %v311
        %v620 = vunpack.c.l.b16 %v312
        %v621 = vunpack.c.h.b16 %v312
        %v622 = vunpack.c.l.b16 %v313
        %v623 = vunpack.c.h.b16 %v313
        %v624 = vunpack.c.l.b16 %v314
        %v625 = vunpack.c.h.b16 %v314
        %v626 = vunpack.c.l.b16 %v315
        %v627 = vunpack.c.h.b16 %v315
        %v628 = vunpack.c.l.b16 %v316
        %v629 = vunpack.c.h.b16 %v316
        %v630 = vunpack.c.l.b16 %v317
        %v631 = vunpack.c.h.b16 %v317
        %v632 = vunpack.c.l.b16 %v318
        %v633 = vunpack.c.h.b16 %v318
        %v634 = vunpack.c.l.b16 %v319
        %v635 = vunpack.c.h.b16 %v319
        %v636 = vunpack.c.l.b16 %v320
        %v637 = vunpack.c.h.b16 %v320
        %v638 = vunpack.c.l.b16 %v321
        %v639 = vunpack.c.h.b16 %v321
        %v640 = vunpack.c.l.b16 %v322
        %v641 = vunpack.c.h.b16 %v322
        %v642 = vunpack.c.l.b16 %v323
        %v643 = vunpack.c.h.b16 %v323
        %v644 = vunpack.c.l.b16 %v324
        %v645 = vunpack.c.h.b16 %v324
        %v646 = vunpack.c.l.b16 %v325
        %v647 = vunpack.c.h.b16 %v325
        %v648 = vunpack.c.l.b16 %v326
        %v649 = vunpack.c.h.b16 %v326
        %v650 = vunpack.c.l.b16 %v327
        %v651 = vunpack.c.h.b16 %v327
        %v652 = vunpack.c.l.b16 %v328
        %v653 = vunpack.c.h.b16 %v328
        %v654 = vunpack.c.l.b16 %v329
        %v655 = vunpack.c.h.b16 %v329
        %v656 = vunpack.c.l.b16 %v330
        %v657 = vunpack.c.h.b16 %v330
        %v658 = vunpack.c.l.b16 %v331
        %v659 = vunpack.c.h.b16 %v331
        %v660 = vunpack.c.l.b16 %v332
        %v661 = vunpack.c.h.b16 %v332
        %v662 = vunpack.c.l.b16 %v333
        %v663 = vunpack.c.h.b16 %v333
        %v664 = vunpack.c.l.b16 %v334
        %v665 = vunpack.c.h.b16 %v334
        %v666 = vunpack.c.l.b16 %v335
        %v667 = vunpack.c.h.b16 %v335
        %v668 = vunpack.c.l.b16 %v336
        %v669 = vunpack.c.h.b16 %v336
        %v670 = vunpack.c.l.b16 %v337
        %v671 = vunpack.c.h.b16 %v337
        %v672 = vunpack.c.l.b16 %v338
        %v673 = vunpack.c.h.b16 %v338
        %v674 = vunpack.c.l.b16 %v339
        %v675 = vunpack.c.h.b16 %v339
        %v676 = vunpack.c.l.b16 %v340
        %v677 = vunpack.c.h.b16 %v340
        %v678 = vunpack.c.l.b16 %v341
        %v679 = vunpack.c.h.b16 %v341
        %v680 = vunpack.c.l.b16 %v342
        %v681 = vunpack.c.h.b16 %v342
        %v682 = vunpack.c.l.b16 %v343
        %v683 = vunpack.c.h.b16 %v343
        %v684 = vunpack.c.l.b16 %v344
        %v685 = vunpack.c.h.b16 %v344
        %v686 = vunpack.c.l.b16 %v345
        %v687 = vunpack.c.h.b16 %v345
        %v688 = vunpack.c.l.b16 %v346
        %v689 = vunpack.c.h.b16 %v346
        %v690 = vunpack.c.l.b16 %v347
        %v691 = vunpack.c.h.b16 %v347
        %v692 = vunpack.c.l.b16 %v348
        %v693 = vunpack.c.h.b16 %v348
        %v694 = vunpack.c.l.b16 %v349
        %v695 = vunpack.c.h.b16 %v349
        %v696 = vunpack.c.l.b16 %v350
        %v697 = vunpack.c.h.b16 %v350
        %v698 = vunpack.c.l.b16 %v351
        %v699 = vunpack.c.h.b16 %v351
        %v700 = vunpack.c.l.b16 %v352
        %v701 = vunpack.c.h.b16 %v352
        %v702 = vunpack.c.l.b16 %v353
        %v703 = vunpack.c.h.b16 %v353
        %v704 = vunpack.c.l.b16 %v354
        %v705 = vunpack.c.h.b16 %v354
        %v706 = vunpack.c.l.b16 %v355
        %v707 = vunpack.c.h.b16 %v355
        %v708 = vunpack.c.l.b16 %v356
        %v709 = vunpack.c.h.b16 %v356
        %v710 = vunpack.c.l.b16 %v357
        %v711 = vunpack.c.h.b16 %v357
        %v712 = vunpack.c.l.b16 %v358
        %v713 = vunpack.c.h.b16 %v358
        %v714 = vunpack.c.l.b16 %v359
        %v715 = vunpack.c.h.b16 %v359
        %v716 = vunpack.c.l.b16 %v360
        %v717 = vunpack.c.h.b16 %v360
        %v718 = vunpack.c.l.b16 %v361
        %v719 = vunpack.c.h.b16 %v361
        %v720 = vunpack.c.l.b16 %v362
        %v721 = vunpack.c.h.b16 %v362
        %v722 = vunpack.c.l.b16 %v363
        %v723 = vunpack.c.h.b16 %v363
        %v724 = vunpack.c.l.b16 %v364
        %v725 = vunpack.c.h.b16 %v364
        %v726 = vunpack.c.l.b16 %v365
        %v727 = vunpack.c.h.b16 %v365
        %v728 = vunpack.c.l.b16 %v366
        %v729 = vunpack.c.h.b16 %v366
        %v730 = vunpack.c.l.b16 %v367
        %v731 = vunpack.c.h.b16 %v367
        %v732 = vunpack.c.l.b16 %v368
        %v733 = vunpack.c.h.b16 %v368
        %v734 = vunpack.c.l.b16 %v369
        %v735 = vunpack.c.h.b16 %v369
        %v736 = vunpack.c.l.b16 %v370
        %v737 = vunpack.c.h.b16 %v370
        %v738 = vunpack.c.l.b16 %v371
        %v739 = vunpack.c.h.b16 %v371
        %v740 = vunpack.c.l.b16 %v372
        %v741 = vunpack.c.h.b16 %v372
        %v742 = vunpack.c.l.b16 %v373
        %v743 = vunpack.c.h.b16 %v373
        %v744 = vunpack.c.l.b16 %v374
        %v745 = vunpack.c.h.b16 %v374
        %v746 = vunpack.c.l.b16 %v375
        %v747 = vunpack.c.h.b16 %v375
        %v748 = vunpack.c.l.b16 %v376
        %v749 = vunpack.c.h.b16 %v376
        %v750 = vunpack.c.l.b16 %v377
        %v751 = vunpack.c.h.b16 %v377
        %v752 = vunpack.c.l.b16 %v378
        %v753 = vunpack.c.h.b16 %v378
        %v754 = vunpack.c.l.b16 %v379
        %v755 = vunpack.c.h.b16 %v379
        %v756 = vunpack.c.l.b16 %v380
        %v757 = vunpack.c.h.b16 %v380
        %v758 = vunpack.c.l.b16 %v381
        %v759 = vunpack.c.h.b16 %v381
        %v760 = vunpack.c.l.b16 %v382
        %v761 = vunpack.c.h.b16 %v382
        %v762 = vunpack.c.l.b16 %v383
        %v763 = vunpack.c.h.b16 %v383
        %v764 = vunpack.c.l.b16 %v384
        %v765 = vunpack.c.h.b16 %v384
        %v766 = vunpack.c.l.b16 %v385
        %v767 = vunpack.c.h.b16 %v385
        %v768 = vunpack.c.l.b16 %v386
        %v769 = vunpack.c.h.b16 %v386
        %v770 = vunpack.c.l.b16 %v387
        %v771 = vunpack.c.h.b16 %v387
        %v772 = vpack.c.b16 %v550, %v548
        %v773 = vpack.c.b16 %v551, %v549
        %v774 = vpack.c.b16 %v554, %v552
        %v775 = vpack.c.b16 %v555, %v553
        %v776 = vpack.c.b16 %v558, %v556
        %v777 = vpack.c.b16 %v559, %v557
        %v778 = vpack.c.b16 %v562, %v560
        %v779 = vpack.c.b16 %v563, %v561
        %v780 = vpack.c.b16 %v566, %v564
        %v781 = vpack.c.b16 %v567, %v565
        %v782 = vpack.c.b16 %v570, %v568
        %v783 = vpack.c.b16 %v571, %v569
        %v784 = vpack.c.b16 %v574, %v572
        %v785 = vpack.c.b16 %v575, %v573
        %v786 = vpack.c.b16 %v578, %v576
        %v787 = vpack.c.b16 %v579, %v577
        %v788 = vpack.c.b16 %v582, %v580
        %v789 = vpack.c.b16 %v583, %v581
        %v790 = vpack.c.b16 %v586, %v584
        %v791 = vpack.c.b16 %v587, %v585
        %v792 = vpack.c.b16 %v590, %v588
        %v793 = vpack.c.b16 %v591, %v589
        %v794 = vpack.c.b16 %v594, %v592
        %v795 = vpack.c.b16 %v595, %v593
        %v796 = vpack.c.b16 %v598, %v596
        %v797 = vpack.c.b16 %v599, %v597
        %v798 = vpack.c.b16 %v602, %v600
        %v799 = vpack.c.b16 %v603, %v601
        %v800 = vpack.c.b16 %v606, %v604
        %v801 = vpack.c.b16 %v607, %v605
        %v802 = vpack.c.b16 %v610, %v608
        %v803 = vpack.c.b16 %v611, %v609
        %v804 = vpack.c.b16 %v614, %v612
        %v805 = vpack.c.b16 %v615, %v613
        %v806 = vpack.c.b16 %v618, %v616
        %v807 = vpack.c.b16 %v619, %v617
        %v808 = vpack.c.b16 %v622, %v620
        %v809 = vpack.c.b16 %v623, %v621
        %v810 = vpack.c.b16 %v626, %v624
        %v811 = vpack.c.b16 %v627, %v625
        %v812 = vpack.c.b16 %v630, %v628
        %v813 = vpack.c.b16 %v631, %v629
        %v814 = vpack.c.b16 %v634, %v632
        %v815 = vpack.c.b16 %v635, %v633
        %v816 = vpack.c.b16 %v638, %v636
        %v817 = vpack.c.b16 %v639, %v637
        %v818 = vpack.c.b16 %v642, %v640
        %v819 = vpack.c.b16 %v643, %v641
        %v820 = vpack.c.b16 %v646, %v644
        %v821 = vpack.c.b16 %v647, %v645
        %v822 = vpack.c.b16 %v650, %v648
        %v823 = vpack.c.b16 %v651, %v649
        %v824 = vpack.c.b16 %v654, %v652
        %v825 = vpack.c.b16 %v655, %v653
        %v826 = vpack.c.b16 %v658, %v656
        %v827 = vpack.c.b16 %v659, %v657
        %v828 = vpack.c.b16 %v662, %v660
        %v829 = vpack.c.b16 %v663, %v661
        %v830 = vpack.c.b16 %v666, %v664
        %v831 = vpack.c.b16 %v667, %v665
        %v832 = vpack.c.b16 %v670, %v668
        %v833 = vpack.c.b16 %v671, %v669
        %v834 = vpack.c.b16 %v674, %v672
        %v835 = vpack.c.b16 %v675, %v673
        %v836 = vpack.c.b16 %v678, %v676
        %v837 = vpack.c.b16 %v679, %v677
        %v838 = vpack.c.b16 %v682, %v680
        %v839 = vpack.c.b16 %v683, %v681
        %v840 = vpack.c.b16 %v686, %v684
        %v841 = vpack.c.b16 %v687, %v685
        %v842 = vpack.c.b16 %v690, %v688
        %v843 = vpack.c.b16 %v691, %v689
        %v844 = vpack.c.b16 %v694, %v692
        %v845 = vpack.c.b16 %v695, %v693
        %v846 = vpack.c.b16 %v698, %v696
        %v847 = vpack.c.b16 %v699, %v697
        %v848 = vpack.c.b16 %v702, %v700
        %v849 = vpack.c.b16 %v703, %v701
        %v850 = vpack.c.b16 %v706, %v704
        %v851 = vpack.c.b16 %v707, %v705
        %v852 = vpack.c.b16 %v710, %v708
        %v853 = vpack.c.b16 %v711, %v709
        %v854 = vpack.c.b16 %v714, %v712
        %v855 = vpack.c.b16 %v715, %v713
        %v856 = vpack.c.b16 %v718, %v716
        %v857 = vpack.c.b16 %v719, %v717
        %v858 = vpack.c.b16 %v722, %v720
        %v859 = vpack.c.b16 %v723, %v721
        %v860 = vpack.c.b16 %v726, %v724
        %v861 = vpack.c.b16 %v727, %v725
        %v862 = vpack.c.b16 %v730, %v728
        %v863 = vpack.c.b16 %v731, %v729
        %v864 = vpack.c.b16 %v734, %v732
        %v865 = vpack.c.b16 %v735, %v733
        %v866 = vpack.c.b16 %v738, %v736
        %v867 = vpack.c.b16 %v739, %v737
        %v868 = vpack.c.b16 %v742, %v740
        %v869 = vpack.c.b16 %v743, %v741
        %v870 = vpack.c.b16 %v746, %v744
        %v871 = vpack.c.b16 %v747, %v745
        %v872 = vpack.c.b16 %v750, %v748
        %v873 = vpack.c.b16 %v751, %v749
        %v874 = vpack.c.b16 %v754, %v752
        %v875 = vpack.c.b16 %v755, %v753
        %v876 = vpack.c.b16 %v758, %v756
        %v877 = vpack.c.b16 %v759, %v757
        %v878 = vpack.c.b16 %v762, %v760
        %v879 = vpack.c.b16 %v763, %v761
        %v880 = vpack.c.b16 %v766, %v764
        %v881 = vpack.c.b16 %v767, %v765
        %v882 = vpack.c.b16 %v770, %v768
        %v883 = vpack.c.b16 %v771, %v769
        %996 = vmatprep.subr.bf16.mxu0 %v773
        %997 = vmatpush1.bf16.msra.mxu0 %v772
        %998 = vmatprep.subr.bf16.mxu0 %v775
        %999 = vmatpush1.bf16.msra.mxu0 %v774
        %1000 = vmatprep.subr.bf16.mxu0 %v777
        %1001 = vmatpush1.bf16.msra.mxu0 %v776
        %1002 = vmatprep.subr.bf16.mxu0 %v779
        %1003 = vmatpush1.bf16.msra.mxu0 %v778
        %1004 = vmatprep.subr.bf16.mxu0 %v781
        %1005 = vmatpush1.bf16.msra.mxu0 %v780
        %1006 = vmatprep.subr.bf16.mxu0 %v783
        %1007 = vmatpush1.bf16.msra.mxu0 %v782
        %1008 = vmatprep.subr.bf16.mxu0 %v785
        %1009 = vmatpush1.bf16.msra.mxu0 %v784
        %1010 = vmatprep.subr.bf16.mxu0 %v787
        %1011 = vmatpush1.bf16.msra.mxu0 %v786
        %1012 = vmatprep.subr.bf16.mxu0 %v789
        %1013 = vmatpush1.bf16.msra.mxu0 %v788
        %1014 = vmatprep.subr.bf16.mxu0 %v791
        %1015 = vmatpush1.bf16.msra.mxu0 %v790
        %1016 = vmatprep.subr.bf16.mxu0 %v793
        %1017 = vmatpush1.bf16.msra.mxu0 %v792
        %1018 = vmatprep.subr.bf16.mxu0 %v795
        %1019 = vmatpush1.bf16.msra.mxu0 %v794
        %1020 = vmatprep.subr.bf16.mxu0 %v797
        %1021 = vmatpush1.bf16.msra.mxu0 %v796
        %1022 = vmatprep.subr.bf16.mxu0 %v799
        %1023 = vmatpush1.bf16.msra.mxu0 %v798
        %1024 = vmatprep.subr.bf16.mxu0 %v801
        %1025 = vmatpush1.bf16.msra.mxu0 %v800
        %1026 = vmatprep.subr.bf16.mxu0 %v803
        %1027 = vmatpush1.bf16.msra.mxu0 %v802
        %1028 = vmatprep.mubr.bf16.mxu0 %v423
        %1029 = vmatmul.mubr.bf16.gmra.mrb[0].mxu0 %v422
        %v1030 = vpop.f32.mrb[0].mxu0
        %v1031 = vadd.f32 %v393, %v1030
        %v1032 = vpop.f32.mrb[0].mxu0
        %v1033 = vadd.f32 %v397, %v1032
        %v1034 = vpop.f32.mrb[0].mxu0
        %v1035 = vadd.f32 %v393, %v1034
        %v1036 = vpop.f32.mrb[0].mxu0
        %v1037 = vadd.f32 %v397, %v1036
        %1038 = vdwg.mxu0
        %1039 = vmatprep.subr.bf16.mxu0 %v805
        %1040 = vmatpush1.bf16.msra.mxu0 %v804
        %1041 = vmatprep.subr.bf16.mxu0 %v807
        %1042 = vmatpush1.bf16.msra.mxu0 %v806
        %1043 = vmatprep.subr.bf16.mxu0 %v809
        %1044 = vmatpush1.bf16.msra.mxu0 %v808
        %1045 = vmatprep.subr.bf16.mxu0 %v811
        %1046 = vmatpush1.bf16.msra.mxu0 %v810
        %1047 = vmatprep.subr.bf16.mxu0 %v813
        %1048 = vmatpush1.bf16.msra.mxu0 %v812
        %1049 = vmatprep.subr.bf16.mxu0 %v815
        %1050 = vmatpush1.bf16.msra.mxu0 %v814
        %1051 = vmatprep.subr.bf16.mxu0 %v817
        %1052 = vmatpush1.bf16.msra.mxu0 %v816
        %1053 = vmatprep.subr.bf16.mxu0 %v819
        %1054 = vmatpush1.bf16.msra.mxu0 %v818
        %1055 = vmatprep.subr.bf16.mxu0 %v821
        %1056 = vmatpush1.bf16.msra.mxu0 %v820
        %1057 = vmatprep.subr.bf16.mxu0 %v823
        %1058 = vmatpush1.bf16.msra.mxu0 %v822
        %1059 = vmatprep.subr.bf16.mxu0 %v825
        %1060 = vmatpush1.bf16.msra.mxu0 %v824
        %1061 = vmatprep.subr.bf16.mxu0 %v827
        %1062 = vmatpush1.bf16.msra.mxu0 %v826
        %1063 = vmatprep.subr.bf16.mxu0 %v829
        %1064 = vmatpush1.bf16.msra.mxu0 %v828
        %1065 = vmatprep.subr.bf16.mxu0 %v831
        %1066 = vmatpush1.bf16.msra.mxu0 %v830
        %1067 = vmatprep.subr.bf16.mxu0 %v833
        %1068 = vmatpush1.bf16.msra.mxu0 %v832
        %1069 = vmatprep.subr.bf16.mxu0 %v835
        %1070 = vmatpush1.bf16.msra.mxu0 %v834
        %1071 = vmatprep.mubr.bf16.mxu0 %v425
        %1072 = vmatmul.mubr.bf16.gmra.mrb[0].mxu0 %v424
        %v1073 = vpop.f32.mrb[0].mxu0
        %v1074 = vadd.f32 %v1031, %v1073
        %v1075 = vpop.f32.mrb[0].mxu0
        %v1076 = vadd.f32 %v1033, %v1075
        %v1077 = vpop.f32.mrb[0].mxu0
        %v1078 = vadd.f32 %v1035, %v1077
        %v1079 = vpop.f32.mrb[0].mxu0
        %v1080 = vadd.f32 %v1037, %v1079
        %1081 = vdwg.mxu0
        %1082 = vmatprep.subr.bf16.mxu0 %v837
        %1083 = vmatpush1.bf16.msra.mxu0 %v836
        %1084 = vmatprep.subr.bf16.mxu0 %v839
        %1085 = vmatpush1.bf16.msra.mxu0 %v838
        %1086 = vmatprep.subr.bf16.mxu0 %v841
        %1087 = vmatpush1.bf16.msra.mxu0 %v840
        %1088 = vmatprep.subr.bf16.mxu0 %v843
        %1089 = vmatpush1.bf16.msra.mxu0 %v842
        %1090 = vmatprep.subr.bf16.mxu0 %v845
        %1091 = vmatpush1.bf16.msra.mxu0 %v844
        %1092 = vmatprep.subr.bf16.mxu0 %v847
        %1093 = vmatpush1.bf16.msra.mxu0 %v846
        %1094 = vmatprep.subr.bf16.mxu0 %v849
        %1095 = vmatpush1.bf16.msra.mxu0 %v848
        %1096 = vmatprep.subr.bf16.mxu0 %v851
        %1097 = vmatpush1.bf16.msra.mxu0 %v850
        %1098 = vmatprep.subr.bf16.mxu0 %v853
        %1099 = vmatpush1.bf16.msra.mxu0 %v852
        %1100 = vmatprep.subr.bf16.mxu0 %v855
        %1101 = vmatpush1.bf16.msra.mxu0 %v854
        %1102 = vmatprep.subr.bf16.mxu0 %v857
        %1103 = vmatpush1.bf16.msra.mxu0 %v856
        %1104 = vmatprep.subr.bf16.mxu0 %v859
        %1105 = vmatpush1.bf16.msra.mxu0 %v858
        %1106 = vmatprep.subr.bf16.mxu0 %v861
        %1107 = vmatpush1.bf16.msra.mxu0 %v860
        %1108 = vmatprep.subr.bf16.mxu0 %v863
        %1109 = vmatpush1.bf16.msra.mxu0 %v862
        %1110 = vmatprep.subr.bf16.mxu0 %v865
        %1111 = vmatpush1.bf16.msra.mxu0 %v864
        %1112 = vmatprep.subr.bf16.mxu0 %v867
        %1113 = vmatpush1.bf16.msra.mxu0 %v866
        %1114 = vmatprep.mubr.bf16.mxu0 %v427
        %1115 = vmatmul.mubr.bf16.gmra.mrb[0].mxu0 %v426
        %v1116 = vpop.f32.mrb[0].mxu0
        %v1117 = vadd.f32 %v1074, %v1116
        %v1118 = vpop.f32.mrb[0].mxu0
        %v1119 = vadd.f32 %v1076, %v1118
        %v1120 = vpop.f32.mrb[0].mxu0
        %v1121 = vadd.f32 %v1078, %v1120
        %v1122 = vpop.f32.mrb[0].mxu0
        %v1123 = vadd.f32 %v1080, %v1122
        %1124 = vdwg.mxu0
        %1125 = vmatprep.subr.bf16.mxu0 %v869
        %1126 = vmatpush1.bf16.msra.mxu0 %v868
        %1127 = vmatprep.subr.bf16.mxu0 %v871
        %1128 = vmatpush1.bf16.msra.mxu0 %v870
        %1129 = vmatprep.subr.bf16.mxu0 %v873
        %1130 = vmatpush1.bf16.msra.mxu0 %v872
        %1131 = vmatprep.subr.bf16.mxu0 %v875
        %1132 = vmatpush1.bf16.msra.mxu0 %v874
        %1133 = vmatprep.subr.bf16.mxu0 %v877
        %1134 = vmatpush1.bf16.msra.mxu0 %v876
        %1135 = vmatprep.subr.bf16.mxu0 %v879
        %1136 = vmatpush1.bf16.msra.mxu0 %v878
        %1137 = vmatprep.subr.bf16.mxu0 %v881
        %1138 = vmatpush1.bf16.msra.mxu0 %v880
        %1139 = vmatprep.subr.bf16.mxu0 %v883
        %1140 = vmatpush1.bf16.msra.mxu0 %v882
        %1141 = vmatprep.subr.bf16.mxu0 0
        %1142 = vmatpush1.bf16.msra.mxu0 0
        %1143 = vmatprep.subr.bf16.mxu0 0
        %1144 = vmatpush1.bf16.msra.mxu0 0
        %1145 = vmatprep.subr.bf16.mxu0 0
        %1146 = vmatpush1.bf16.msra.mxu0 0
        %1147 = vmatprep.subr.bf16.mxu0 0
        %1148 = vmatpush1.bf16.msra.mxu0 0
        %1149 = vmatprep.subr.bf16.mxu0 0
        %1150 = vmatpush1.bf16.msra.mxu0 0
        %1151 = vmatprep.subr.bf16.mxu0 0
        %1152 = vmatpush1.bf16.msra.mxu0 0
        %1153 = vmatprep.subr.bf16.mxu0 0
        %1154 = vmatpush1.bf16.msra.mxu0 0
        %1155 = vmatprep.subr.bf16.mxu0 0
        %1156 = vmatpush1.bf16.msra.mxu0 0
        %1157 = vmatprep.mubr.bf16.mxu0 0
        %1158 = vmatmul.mubr.bf16.gmra.mrb[0].mxu0 %v428
        %v1159 = vpop.f32.mrb[0].mxu0
        %v1160 = vadd.f32 %v1117, %v1159
        %v1161 = vpop.f32.mrb[0].mxu0
        %v1162 = vadd.f32 %v1119, %v1161
        %v1163 = vpop.f32.mrb[0].mxu0
        %v1164 = vadd.f32 %v1121, %v1163
        %v1165 = vpop.f32.mrb[0].mxu0
        %v1166 = vadd.f32 %v1123, %v1165
        %1167 = vdwg.mxu0
        %v1168 = vmax.f32 %v1160, 0.0
        %v1169 = vmax.f32 %v1162, 0.0
        %v1170 = vmax.f32 %v1164, 0.0
        %v1171 = vmax.f32 %v1166, 0.0
        %v1172 = vmin.f32 %v1168, 6.0
        %v1173 = vmin.f32 %v1169, 6.0
        %v1174 = vmin.f32 %v1170, 6.0
        %v1175 = vmin.f32 %v1171, 6.0
        %s1176 = sld [smem:[#allocation2]]
        %s1177 = sld [smem:[#allocation2 + $0x1]]
        %s1178 = sld [smem:[#allocation2 + $0x2]]
        %v1179 = vstv %s1176
        %v1180 = vmul.f32 %v1179, %v1172
        %v1181 = vmul.f32 %v1179, %v1174
        %v1182 = vstv %s1177
        %v1183 = vmul.f32 %v1182, %v1173
        %v1184 = vmul.f32 %v1182, %v1175
        %v1185 = vadd.f32 %v1180, %v1183
        %v1186 = vadd.f32 %v1181, %v1184
        %v1187 = vld [vmem:[%s259] sm:$0xff]
        %v1188 = vld [vmem:[%s259 + $0x8] sm:$0xff]
        %v1189 = vstv %s1178
        %v1190 = vmul.f32 %v1189, %v1187
        %v1191 = vmul.f32 %v1189, %v1188
        %v1192 = vadd.f32 %v1185, %v1190
        %v1193 = vadd.f32 %v1186, %v1191
        %1194 = vst [vmem:[%s265] sm:$0xff] %v1192
        %1195 = vst [vmem:[%s265 + $0x8] sm:$0xff] %v1193
        %s1196 = smul.u32 2, %s17
        %p1197 = scmp.lt.s32.totalorder %s1196, 3
        %s1198 = scalar_select %p1197, %s1196, 3
        %s1199 = smul.addr %s1198, 8
        %s1200 = scalar_lea.vmem %s5, %s1199
        // Predicated region
        $region45: #{mixed_operation_forward.1} parent=39 // pred_check
          %p1201 = pneg %p150
        $region46: #{mixed_operation_forward.1} parent=39 // pred_check_branch
          %1203 = sbr.rel (%p1201) target = $region48
        $region47: #{mixed_operation_forward.1} parent=39 // pred_region
          %s1204 = smul.u32 2, %s17
        $region48: #{mixed_operation_forward.1} parent=39 // pred_fallthru
          _
      $region40: #{mixed_operation_forward.1} parent=5 // pred_fallthru
        _
      %p1205 = scmp.le.s32.totalorder 2, %s12
      // Predicated region
      $region49: #{mixed_operation_forward.1} parent=5 // pred_check
        %p1206 = pneg %p1205
      $region50: #{mixed_operation_forward.1} parent=5 // pred_check_branch
        %1208 = sbr.rel (%p1206) target = $region52
      $region51: #{mixed_operation_forward.1} parent=5 // pred_region
        %s1209 = ssub.s32 %s12, 2
        // Predicated region
        $region53: #{mixed_operation_forward.1} parent=51 // pred_check
          %p1210 = pneg %p156
        $region54: #{mixed_operation_forward.1} parent=51 // pred_check_branch
          %1212 = sbr.rel (%p1210) target = $region56
        $region55: #{mixed_operation_forward.1} parent=51 // pred_region
          %s1213 = smul.u32 2, %s18
          %p1214 = scmp.lt.s32.totalorder %s1213, 3
          %s1215 = scalar_select %p1214, %s1213, 3
          %s1216 = smul.addr %s1215, 8
          %s1217 = scalar_lea.vmem %s5, %s1216
        $region56: #{mixed_operation_forward.1} parent=51 // pred_fallthru
          _
      $region52: #{mixed_operation_forward.1} parent=5 // pred_fallthru
        _
    $region6: #{mixed_operation_forward.1} parent=1 // loop_footer
      %s16 = sadd.s32 1, %s12
    $region7: #{mixed_operation_forward.1} parent=1 // loop_footer_branch
      %11 = sbr.rel target = $region3
    $region8: #{mixed_operation_forward.1} parent=1 // loop_exit
      _
    %1218 = vsyncpa [#allocation3], 1
    %s1219 = scalar_lea.sflag [#allocation3], 1
    %1220 = vsyncpa %s1219, 1

</llo_original>
